<compile_context>
chip_gen: v5e
topology: v5e:2x2
jax: 0.10.0
libtpu: 0.0.40
codegen_flags: <defaults>
</compile_context>

<pallas_src>
import jax
import jax.numpy as jnp
from jax.experimental import pallas as pl
from jax.experimental.pallas import tpu as pltpu


OUT_PAD = 128  # lane-dense packed output width (logits lanes + 1 value lane + zero pad)


def _round_up(x, m):
    return (x + m - 1) // m * m


# ----------------------------------------------------------------------------- kernel
def _actor_critic_kernel(x_ref, scale_ref,
                         w1_ref, b1_ref, w2_ref, b2_ref,      # encoder (padded)
                         wh1_ref, bh1_ref,                    # fused actor/critic fc1
                         wh2_ref, bh2_ref,                    # packed actor/critic fc2
                         out_ref):
    x = x_ref[...]

    # encoder: Linear + ReLU, Linear + ReLU   (hidden padded to H_PAD lanes, pads stay 0)
    h = jnp.dot(x, w1_ref[...], preferred_element_type=jnp.float32) + b1_ref[...]
    h = jnp.maximum(h, 0.0)
    h = jnp.dot(h, w2_ref[...], preferred_element_type=jnp.float32) + b2_ref[...]
    h = jnp.maximum(h, 0.0)

    # fused head layer 1: [actor_hidden | critic_hidden] in one wide matmul
    hc = jnp.dot(h, wh1_ref[...], preferred_element_type=jnp.float32) + bh1_ref[...]
    hc = jnp.maximum(hc, 0.0)

    # fused head layer 2 (block-diagonal packing): lanes [0:A) = actor logits,
    # lane A = critic value, remaining lanes = 0.  scale_ref carries 1/temperature on
    # the logit lanes and 1.0 on the value lane -> temperature stays a runtime value.
    out = jnp.dot(hc, wh2_ref[...], preferred_element_type=jnp.float32) + bh2_ref[...]
    out_ref[...] = (out * scale_ref[...]).astype(out_ref.dtype)


# ----------------------------------------------------------------------------- wrapper
def _forward_padded(latent, packed, action_size, temperature):
    """Runs the fused kernel; returns (logits [B, A] f32, value [B, 1] f32)."""
    B, latent_size = latent.shape

    # batch tiling: TB a multiple of 8 (sublane rule), capped at 128.  Weights + two
    # double-buffered activation tiles stay far below the 32 MiB scoped-VMEM default,
    # which also satisfies v7x's smaller 64 MiB physical VMEM.
    TB = min(128, _round_up(B, 8))
    B_pad = _round_up(B, TB)
    if B_pad != B:
        latent = jnp.pad(latent, ((0, B_pad - B), (0, 0)))
    n_tiles = B_pad // TB

    # per-lane scale row: logits lanes get 1/temperature, value/pad lanes get 1.0
    inv_temp = 1.0 / temperature
    scale = jnp.where(jnp.arange(OUT_PAD) < action_size, inv_temp, 1.0)
    scale = scale.reshape(1, OUT_PAD).astype(jnp.float32)

    weight_names = ("w1", "b1", "w2", "b2", "wh1", "bh1", "wh2", "bh2")
    weights = tuple(packed[name] for name in weight_names)

    batch_spec = pl.BlockSpec((TB, latent_size), lambda i: (i, 0))
    resident = lambda arr: pl.BlockSpec(arr.shape, lambda i: (0, 0))  # VMEM-resident

    out = pl.pallas_call(
        _actor_critic_kernel,
        out_shape=jax.ShapeDtypeStruct((B_pad, OUT_PAD), jnp.float32),
        grid=(n_tiles,),
        in_specs=[batch_spec, resident(scale)] + [resident(w) for w in weights],
        out_specs=pl.BlockSpec((TB, OUT_PAD), lambda i: (i, 0)),
        compiler_params=pltpu.CompilerParams(
            dimension_semantics=("parallel",)),
    )(latent, scale, *weights)

    logits = out[:B, :action_size]
    value = out[:B, action_size:action_size + 1]
    return logits, value


def actor_critic_forward(latent, packed, action_size, *, temperature=1.0,
                         deterministic=False, rng_key=None):
    """Pallas-backed equivalent of ActorCritic.forward -> (action [B] i32, value [B,1] f32)."""
    if isinstance(temperature, (int, float)) and temperature <= 0:
        raise ValueError("temperature must be > 0")

    logits, value = _forward_padded(latent, packed, action_size, temperature)

    if deterministic:
        # TODO(synk): could fuse row-argmax into the kernel epilogue to skip the
        # padded-logits HBM writeback when only the action is needed.
        action = jnp.argmax(logits, axis=-1).astype(jnp.int32)
    else:
        if rng_key is None:
            raise ValueError("rng_key must be provided when deterministic=False")
        # torch.distributions.Categorical(logits=...).sample() equivalent (kept in XLA
        # to preserve jax.random semantics).
        action = jax.random.categorical(rng_key, logits, axis=-1).astype(jnp.int32)
    return action, value


# ------------------------------------------------------------------- param init / packing
def _init_linear(key, fan_in, fan_out):
    """Deterministic init matching nn.Linear's U(-1/sqrt(fan_in), 1/sqrt(fan_in))."""
    kw, kb = jax.random.split(key)
    bound = 1.0 / jnp.sqrt(fan_in)
    w = jax.random.uniform(kw, (fan_in, fan_out), jnp.float32, -bound, bound)
    b = jax.random.uniform(kb, (1, fan_out), jnp.float32, -bound, bound)
    return w, b


def init_params(key, latent_size, hidden_size, action_size):
    keys = jax.random.split(key, 6)
    w1, b1 = _init_linear(keys[0], latent_size, hidden_size)
    w2, b2 = _init_linear(keys[1], hidden_size, hidden_size)
    wa1, ba1 = _init_linear(keys[2], hidden_size, hidden_size)
    wa2, ba2 = _init_linear(keys[3], hidden_size, action_size)
    wc1, bc1 = _init_linear(keys[4], hidden_size, hidden_size)
    wc2, bc2 = _init_linear(keys[5], hidden_size, 1)
    return dict(w1=w1, b1=b1, w2=w2, b2=b2,
                wa1=wa1, ba1=ba1, wa2=wa2, ba2=ba2,
                wc1=wc1, bc1=bc1, wc2=wc2, bc2=bc2)


def pack_params(params, latent_size, hidden_size, action_size, dtype=jnp.float32):
    """Zero-pad hidden dims to 128-multiples, fuse actor/critic fc1, and pack
    actor/critic fc2 block-diagonally into one lane-dense [*, 128] projection.
    Done once; exact (pad lanes stay 0 through bias+ReLU).
    NOTE: pass dtype=jnp.bfloat16 for 2x MXU throughput on v6e/v7x (f32 accumulation
    is kept via preferred_element_type); keep f32 on v5e / for bit-exact checks."""
    H = hidden_size
    HP = _round_up(H, 128)
    A = action_size
    assert A + 1 <= OUT_PAD, "action_size + value lane must fit in the 128-lane slab"

    w1 = jnp.zeros((latent_size, HP), dtype).at[:, :H].set(params["w1"])
    b1 = jnp.zeros((1, HP), dtype).at[:, :H].set(params["b1"])
    w2 = jnp.zeros((HP, HP), dtype).at[:H, :H].set(params["w2"])
    b2 = jnp.zeros((1, HP), dtype).at[:, :H].set(params["b2"])

    # fused head fc1: columns [0:H) -> actor hidden, [HP:HP+H) -> critic hidden
    wh1 = (jnp.zeros((HP, 2 * HP), dtype)
           .at[:H, :H].set(params["wa1"])
           .at[:H, HP:HP + H].set(params["wc1"]))
    bh1 = (jnp.zeros((1, 2 * HP), dtype)
           .at[:, :H].set(params["ba1"])
           .at[:, HP:HP + H].set(params["bc1"]))

    # packed head fc2: lanes [0:A) = actor logits (from actor hidden rows),
    # lane A = critic value (from critic hidden rows), other lanes 0.
    wh2 = (jnp.zeros((2 * HP, OUT_PAD), dtype)
           .at[:H, :A].set(params["wa2"])
           .at[HP:HP + H, A].set(params["wc2"][:, 0]))
    bh2 = (jnp.zeros((1, OUT_PAD), dtype)
           .at[:, :A].set(params["ba2"])
           .at[:, A].set(params["bc2"][0, 0]))

    return dict(w1=w1, b1=b1, w2=w2, b2=b2, wh1=wh1, bh1=bh1, wh2=wh2, bh2=bh2)


# ------------------------------------------------------------------------------ reference
def _reference_forward(latent, params, temperature):
    h = jnp.maximum(latent @ params["w1"] + params["b1"], 0.0)
    h = jnp.maximum(h @ params["w2"] + params["b2"], 0.0)
    logits = (jnp.maximum(h @ params["wa1"] + params["ba1"], 0.0)
              @ params["wa2"] + params["ba2"]) / temperature
    value = (jnp.maximum(h @ params["wc1"] + params["bc1"], 0.0)
             @ params["wc2"] + params["bc2"])
    return logits, value


if __name__ == "__main__":
    latent_size, hidden_size, action_size = 16, 32, 8
    batch = 8
    temperature = 0.7

    key = jax.random.PRNGKey(0)
    k_params, k_latent, k_sample = jax.random.split(key, 3)

    params = init_params(k_params, latent_size, hidden_size, action_size)
    packed = pack_params(params, latent_size, hidden_size, action_size)
    latent = jax.random.normal(k_latent, (batch, latent_size), jnp.float32)

    # Stochastic (Categorical-sampled) action + value, like forward(deterministic=False)
    action, value = actor_critic_forward(latent, packed, action_size,
                                         temperature=temperature,
                                         deterministic=False, rng_key=k_sample)
    action, value = jax.block_until_ready((action, value))

    # Deterministic path (argmax) + correctness check against plain-JAX reference.
    det_action, det_value = actor_critic_forward(latent, packed, action_size,
                                                 temperature=temperature,
                                                 deterministic=True)
    logits, value2 = _forward_padded(latent, packed, action_size, temperature)
    det_action, det_value, logits, value2 = jax.block_until_ready(
        (det_action, det_value, logits, value2))

    ref_logits, ref_value = _reference_forward(latent, params, temperature)
    assert jnp.allclose(logits, ref_logits, atol=1e-4, rtol=1e-4), "logits mismatch"
    assert jnp.allclose(det_value, ref_value, atol=1e-4, rtol=1e-4), "value mismatch"
    assert jnp.array_equal(det_action, jnp.argmax(ref_logits, -1)), "action mismatch"
    assert action.shape == (batch,) and value.shape == (batch, 1)

    print("KERNEL_OK")
</pallas_src>

<mosaic_0001>
module attributes {stable_mosaic.version = 11 : i64} {
  func.func @_actor_critic_kernel(%arg0: i32, %arg1: memref<8x16xf32, #tpu.memory_space<vmem>>, %arg2: memref<1x128xf32, #tpu.memory_space<vmem>>, %arg3: memref<16x128xf32, #tpu.memory_space<vmem>>, %arg4: memref<1x128xf32, #tpu.memory_space<vmem>>, %arg5: memref<128x128xf32, #tpu.memory_space<vmem>>, %arg6: memref<1x128xf32, #tpu.memory_space<vmem>>, %arg7: memref<128x256xf32, #tpu.memory_space<vmem>>, %arg8: memref<1x256xf32, #tpu.memory_space<vmem>>, %arg9: memref<256x128xf32, #tpu.memory_space<vmem>>, %arg10: memref<1x128xf32, #tpu.memory_space<vmem>>, %arg11: memref<8x128xf32, #tpu.memory_space<vmem>>) attributes {dimension_semantics = [#tpu.dimension_semantics<parallel>], iteration_bounds = array<i64: 1>, scalar_prefetch = 0 : i64, scratch_operands = 0 : i64, tpu.core_type = #tpu.core_type<tc>, window_params = [{transform_indices = @transform_0, window_bounds = array<i64: 8, 16>}, {pipeline_mode = #tpu.pipeline_mode<synchronous>, transform_indices = @transform_1, window_bounds = array<i64: 1, 128>}, {pipeline_mode = #tpu.pipeline_mode<synchronous>, transform_indices = @transform_2, window_bounds = array<i64: 16, 128>}, {pipeline_mode = #tpu.pipeline_mode<synchronous>, transform_indices = @transform_3, window_bounds = array<i64: 1, 128>}, {pipeline_mode = #tpu.pipeline_mode<synchronous>, transform_indices = @transform_4, window_bounds = array<i64: 128, 128>}, {pipeline_mode = #tpu.pipeline_mode<synchronous>, transform_indices = @transform_5, window_bounds = array<i64: 1, 128>}, {pipeline_mode = #tpu.pipeline_mode<synchronous>, transform_indices = @transform_6, window_bounds = array<i64: 128, 256>}, {pipeline_mode = #tpu.pipeline_mode<synchronous>, transform_indices = @transform_7, window_bounds = array<i64: 1, 256>}, {pipeline_mode = #tpu.pipeline_mode<synchronous>, transform_indices = @transform_8, window_bounds = array<i64: 256, 128>}, {pipeline_mode = #tpu.pipeline_mode<synchronous>, transform_indices = @transform_9, window_bounds = array<i64: 1, 128>}, {transform_indices = @transform_10, window_bounds = array<i64: 8, 128>}]} {
    %c0 = arith.constant 0 : index
    %c0_0 = arith.constant 0 : index
    %0 = vector.load %arg1[%c0, %c0_0] : memref<8x16xf32, #tpu.memory_space<vmem>>, vector<8x16xf32>
    %c0_1 = arith.constant 0 : index
    %c0_2 = arith.constant 0 : index
    %1 = vector.load %arg3[%c0_1, %c0_2] : memref<16x128xf32, #tpu.memory_space<vmem>>, vector<16x128xf32>
    %cst = arith.constant dense<0.000000e+00> : vector<8x128xf32>
    %2 = tpu.matmul %0, %1, %cst {dimension_numbers = #tpu.dot_dimension_numbers<[1], [0], [0], [1], [0, 0, 1, 1], [], []>} : vector<8x16xf32>, vector<16x128xf32>, vector<8x128xf32> -> vector<8x128xf32>
    %c0_3 = arith.constant 0 : index
    %c0_4 = arith.constant 0 : index
    %3 = vector.load %arg4[%c0_3, %c0_4] : memref<1x128xf32, #tpu.memory_space<vmem>>, vector<1x128xf32>
    %4 = vector.broadcast %3 : vector<1x128xf32> to vector<8x128xf32>
    %5 = arith.addf %2, %4 : vector<8x128xf32>
    %cst_5 = arith.constant 0.000000e+00 : f32
    %6 = vector.broadcast %cst_5 : f32 to vector<8x128xf32>
    %7 = arith.maximumf %5, %6 : vector<8x128xf32>
    %c0_6 = arith.constant 0 : index
    %c0_7 = arith.constant 0 : index
    %8 = vector.load %arg5[%c0_6, %c0_7] : memref<128x128xf32, #tpu.memory_space<vmem>>, vector<128x128xf32>
    %cst_8 = arith.constant dense<0.000000e+00> : vector<8x128xf32>
    %9 = tpu.matmul %7, %8, %cst_8 {dimension_numbers = #tpu.dot_dimension_numbers<[1], [0], [0], [1], [0, 0, 1, 1], [], []>} : vector<8x128xf32>, vector<128x128xf32>, vector<8x128xf32> -> vector<8x128xf32>
    %c0_9 = arith.constant 0 : index
    %c0_10 = arith.constant 0 : index
    %10 = vector.load %arg6[%c0_9, %c0_10] : memref<1x128xf32, #tpu.memory_space<vmem>>, vector<1x128xf32>
    %11 = vector.broadcast %10 : vector<1x128xf32> to vector<8x128xf32>
    %12 = arith.addf %9, %11 : vector<8x128xf32>
    %cst_11 = arith.constant 0.000000e+00 : f32
    %13 = vector.broadcast %cst_11 : f32 to vector<8x128xf32>
    %14 = arith.maximumf %12, %13 : vector<8x128xf32>
    %c0_12 = arith.constant 0 : index
    %c0_13 = arith.constant 0 : index
    %15 = vector.load %arg7[%c0_12, %c0_13] : memref<128x256xf32, #tpu.memory_space<vmem>>, vector<128x256xf32>
    %cst_14 = arith.constant dense<0.000000e+00> : vector<8x256xf32>
    %16 = tpu.matmul %14, %15, %cst_14 {dimension_numbers = #tpu.dot_dimension_numbers<[1], [0], [0], [1], [0, 0, 1, 1], [], []>} : vector<8x128xf32>, vector<128x256xf32>, vector<8x256xf32> -> vector<8x256xf32>
    %c0_15 = arith.constant 0 : index
    %c0_16 = arith.constant 0 : index
    %17 = vector.load %arg8[%c0_15, %c0_16] : memref<1x256xf32, #tpu.memory_space<vmem>>, vector<1x256xf32>
    %18 = vector.broadcast %17 : vector<1x256xf32> to vector<8x256xf32>
    %19 = arith.addf %16, %18 : vector<8x256xf32>
    %cst_17 = arith.constant 0.000000e+00 : f32
    %20 = vector.broadcast %cst_17 : f32 to vector<8x256xf32>
    %21 = arith.maximumf %19, %20 : vector<8x256xf32>
    %c0_18 = arith.constant 0 : index
    %c0_19 = arith.constant 0 : index
    %22 = vector.load %arg9[%c0_18, %c0_19] : memref<256x128xf32, #tpu.memory_space<vmem>>, vector<256x128xf32>
    %cst_20 = arith.constant dense<0.000000e+00> : vector<8x128xf32>
    %23 = tpu.matmul %21, %22, %cst_20 {dimension_numbers = #tpu.dot_dimension_numbers<[1], [0], [0], [1], [0, 0, 1, 1], [], []>} : vector<8x256xf32>, vector<256x128xf32>, vector<8x128xf32> -> vector<8x128xf32>
    %c0_21 = arith.constant 0 : index
    %c0_22 = arith.constant 0 : index
    %24 = vector.load %arg10[%c0_21, %c0_22] : memref<1x128xf32, #tpu.memory_space<vmem>>, vector<1x128xf32>
    %25 = vector.broadcast %24 : vector<1x128xf32> to vector<8x128xf32>
    %26 = arith.addf %23, %25 : vector<8x128xf32>
    %c0_23 = arith.constant 0 : index
    %c0_24 = arith.constant 0 : index
    %27 = vector.load %arg2[%c0_23, %c0_24] : memref<1x128xf32, #tpu.memory_space<vmem>>, vector<1x128xf32>
    %28 = vector.broadcast %27 : vector<1x128xf32> to vector<8x128xf32>
    %29 = arith.mulf %26, %28 : vector<8x128xf32>
    %c0_25 = arith.constant 0 : index
    %c0_26 = arith.constant 0 : index
    %30 = vector.load %arg11[%c0_25, %c0_26] : memref<8x128xf32, #tpu.memory_space<vmem>>, vector<8x128xf32>
    tpu.vector_store %arg11[%c0_25, %c0_26], %29 {strides = array<i32>} : memref<8x128xf32, #tpu.memory_space<vmem>>, vector<8x128xf32>,
    return
  }
  func.func @transform_0(%arg0: i32) -> (i32, i32) {
    %c0_i32 = arith.constant 0 : i32
    %c0_i32_0 = arith.constant 0 : i32
    return %arg0, %c0_i32 : i32, i32
  }
  func.func @transform_1(%arg0: i32) -> (i32, i32) {
    %c0_i32 = arith.constant 0 : i32
    %c0_i32_0 = arith.constant 0 : i32
    %c0_i32_1 = arith.constant 0 : i32
    return %c0_i32, %c0_i32_0 : i32, i32
  }
  func.func @transform_2(%arg0: i32) -> (i32, i32) {
    %c0_i32 = arith.constant 0 : i32
    %c0_i32_0 = arith.constant 0 : i32
    %c0_i32_1 = arith.constant 0 : i32
    return %c0_i32, %c0_i32_0 : i32, i32
  }
  func.func @transform_3(%arg0: i32) -> (i32, i32) {
    %c0_i32 = arith.constant 0 : i32
    %c0_i32_0 = arith.constant 0 : i32
    %c0_i32_1 = arith.constant 0 : i32
    return %c0_i32, %c0_i32_0 : i32, i32
  }
  func.func @transform_4(%arg0: i32) -> (i32, i32) {
    %c0_i32 = arith.constant 0 : i32
    %c0_i32_0 = arith.constant 0 : i32
    %c0_i32_1 = arith.constant 0 : i32
    return %c0_i32, %c0_i32_0 : i32, i32
  }
  func.func @transform_5(%arg0: i32) -> (i32, i32) {
    %c0_i32 = arith.constant 0 : i32
    %c0_i32_0 = arith.constant 0 : i32
    %c0_i32_1 = arith.constant 0 : i32
    return %c0_i32, %c0_i32_0 : i32, i32
  }
  func.func @transform_6(%arg0: i32) -> (i32, i32) {
    %c0_i32 = arith.constant 0 : i32
    %c0_i32_0 = arith.constant 0 : i32
    %c0_i32_1 = arith.constant 0 : i32
    return %c0_i32, %c0_i32_0 : i32, i32
  }
  func.func @transform_7(%arg0: i32) -> (i32, i32) {
    %c0_i32 = arith.constant 0 : i32
    %c0_i32_0 = arith.constant 0 : i32
    %c0_i32_1 = arith.constant 0 : i32
    return %c0_i32, %c0_i32_0 : i32, i32
  }
  func.func @transform_8(%arg0: i32) -> (i32, i32) {
    %c0_i32 = arith.constant 0 : i32
    %c0_i32_0 = arith.constant 0 : i32
    %c0_i32_1 = arith.constant 0 : i32
    return %c0_i32, %c0_i32_0 : i32, i32
  }
  func.func @transform_9(%arg0: i32) -> (i32, i32) {
    %c0_i32 = arith.constant 0 : i32
    %c0_i32_0 = arith.constant 0 : i32
    %c0_i32_1 = arith.constant 0 : i32
    return %c0_i32, %c0_i32_0 : i32, i32
  }
  func.func @transform_10(%arg0: i32) -> (i32, i32) {
    %c0_i32 = arith.constant 0 : i32
    %c0_i32_0 = arith.constant 0 : i32
    return %arg0, %c0_i32 : i32, i32
  }
}

</mosaic_0001>

<llo_original>
// kernel: tpu_custom_call.1
$region0: #{tpu_custom_call.1}
  #allocation0 [shape = 'u32[]', space=smem, size = 0x4, offset = 0x4, fixed_abs, tag = 'smem constant byte address 0x4 - core index']
  #allocation1 [shape = 'u32[72,128]{1,0:T(1,128)}', space=vmem, size = 0x9000, scoped, tag = 'internal scratch']
  %s0 = inlined_call_operand.hbm [shape: f32[8,16], index: 0, kind: input, shape index: {}]
  %s1 = inlined_call_operand.hbm [shape: f32[1,128], index: 1, kind: input, shape index: {}]
  %s2 = inlined_call_operand.hbm [shape: f32[16,128], index: 2, kind: input, shape index: {}]
  %s3 = inlined_call_operand.vmem [shape: f32[1,128], index: 3, kind: input, shape index: {}]
  %s4 = inlined_call_operand.hbm [shape: f32[128,128], index: 4, kind: input, shape index: {}]
  %s5 = inlined_call_operand.vmem [shape: f32[1,128], index: 5, kind: input, shape index: {}]
  %s6 = inlined_call_operand.hbm [shape: f32[128,256], index: 6, kind: input, shape index: {}]
  %s7 = inlined_call_operand.vmem [shape: f32[1,256], index: 7, kind: input, shape index: {}]
  %s8 = inlined_call_operand.hbm [shape: f32[256,128], index: 8, kind: input, shape index: {}]
  %s9 = inlined_call_operand.vmem [shape: f32[1,128], index: 9, kind: input, shape index: {}]
  %s10 = inlined_call_operand.hbm [shape: f32[8,128], index: 10, kind: output, shape index: {}]
  %s11 = sld [smem:[#allocation0]]
  $region74: #{tpu_custom_call.1} parent=0
    _
  %s13 = ssub.s32 1, %s11
  %s14 = scalar_select 0, %s13, %s11
  $region1: #{tpu_custom_call.1} parent=0
    #allocation2 [shape = 'u8[4096]{0}', space=vmem, size = 0x1000, scoped, tag = 'input window, operand 0, single buffered']
    #allocation3 [shape = 's32[1]{0}', space=sflag, size = 0x4, scoped, tag = 'scoped memory for tpu_custom_call.1']
    #allocation4 [shape = 's32[1]{0}', space=sflag, size = 0x4, scoped, tag = 'scoped memory for tpu_custom_call.1']
    #allocation5 [shape = 'u8[512]{0}', space=vmem, size = 0x400, scoped, tag = 'input window, operand 1, single buffered']
    #allocation6 [shape = 's32[1]{0}', space=sflag, size = 0x4, scoped, tag = 'scoped memory for tpu_custom_call.1']
    #allocation7 [shape = 'u8[8192]{0}', space=vmem, size = 0x2000, scoped, tag = 'input window, operand 2, single buffered']
    #allocation8 [shape = 'u8[65536]{0}', space=vmem, size = 0x10000, scoped, tag = 'input window, operand 4, single buffered']
    #allocation9 [shape = 's32[1]{0}', space=sflag, size = 0x4, scoped, tag = 'scoped memory for tpu_custom_call.1']
    #allocation10 [shape = 'u8[131072]{0}', space=vmem, size = 0x20000, scoped, tag = 'input window, operand 6, single buffered']
    #allocation11 [shape = 'u8[131072]{0}', space=vmem, size = 0x20000, scoped, tag = 'input window, operand 8, single buffered']
    #allocation12 [shape = 's32[1]{0}', space=sflag, size = 0x4, scoped, tag = 'scoped memory for tpu_custom_call.1']
    #allocation13 [shape = 'u8[4096]{0}', space=vmem, size = 0x1000, scoped, tag = 'output window, operand 0, single buffered']
    %15 = vsyncpa [#allocation3], 0
    %16 = vsyncpa [#allocation6], 0
    %17 = vsyncpa [#allocation9], 0
    %18 = vsyncpa [#allocation12], 0
    %19 = vsyncpa [#allocation4], 0
    // Predicated region
    $region2: #{tpu_custom_call.1} parent=1 // pred_check
      _
    $region3: #{tpu_custom_call.1} parent=1 // pred_check_branch
      %21 = sbr.rel (0) target = $region5
    $region4: #{tpu_custom_call.1} parent=1 // pred_region
      %23 = vsyncadd [#allocation3], 0
      %s25 = sshll.u32 %s0, 4
      %s26 = int_to_ptr.hbm [resolvable:$true] %s25
      %s27 = sshll.u32 [#allocation2], 4
      %s28 = int_to_ptr.vmem [resolvable:$true] %s27
      %30 = dma.hbm_to_vmem [thread:$0]  %s26, 128, %s28, [#allocation3]
    $region5: #{tpu_custom_call.1} parent=1 // pred_fallthru
      _
    // Predicated region
    $region6: #{tpu_custom_call.1} parent=1 // pred_check
      _
    $region7: #{tpu_custom_call.1} parent=1 // pred_check_branch
      %32 = sbr.rel (0) target = $region9
    $region8: #{tpu_custom_call.1} parent=1 // pred_region
      %34 = vsyncadd [#allocation6], 0
      %s36 = sshll.u32 %s1, 4
      %s37 = int_to_ptr.hbm [resolvable:$true] %s36
      %s38 = sshll.u32 [#allocation5], 4
      %s39 = int_to_ptr.vmem [resolvable:$true] %s38
      %41 = dma.hbm_to_vmem [thread:$0]  %s37, 16, %s39, [#allocation6]
    $region9: #{tpu_custom_call.1} parent=1 // pred_fallthru
      _
    // Predicated region
    $region10: #{tpu_custom_call.1} parent=1 // pred_check
      _
    $region11: #{tpu_custom_call.1} parent=1 // pred_check_branch
      %43 = sbr.rel (0) target = $region13
    $region12: #{tpu_custom_call.1} parent=1 // pred_region
      %45 = vsyncadd [#allocation6], 0
      %s46 = sshll.u32 %s2, 4
      %s47 = int_to_ptr.hbm [resolvable:$true] %s46
      %s48 = sshll.u32 [#allocation7], 4
      %s49 = int_to_ptr.vmem [resolvable:$true] %s48
      %54 = dma.hbm_to_vmem [thread:$0]  %s47, 256, %s49, [#allocation6], 128, 128, 8
    $region13: #{tpu_custom_call.1} parent=1 // pred_fallthru
      _
    // Predicated region
    $region14: #{tpu_custom_call.1} parent=1 // pred_check
      _
    $region15: #{tpu_custom_call.1} parent=1 // pred_check_branch
      %56 = sbr.rel (0) target = $region17
    $region16: #{tpu_custom_call.1} parent=1 // pred_region
      _
    $region17: #{tpu_custom_call.1} parent=1 // pred_fallthru
      _
    // Predicated region
    $region18: #{tpu_custom_call.1} parent=1 // pred_check
      _
    $region19: #{tpu_custom_call.1} parent=1 // pred_check_branch
      %58 = sbr.rel (0) target = $region21
    $region20: #{tpu_custom_call.1} parent=1 // pred_region
      %60 = vsyncadd [#allocation9], 0
      %s61 = sshll.u32 %s4, 4
      %s62 = int_to_ptr.hbm [resolvable:$true] %s61
      %s63 = sshll.u32 [#allocation8], 4
      %s64 = int_to_ptr.vmem [resolvable:$true] %s63
      %69 = dma.hbm_to_vmem [thread:$0]  %s62, 2048, %s64, [#allocation9], 128, 128, 8
    $region21: #{tpu_custom_call.1} parent=1 // pred_fallthru
      _
    // Predicated region
    $region22: #{tpu_custom_call.1} parent=1 // pred_check
      _
    $region23: #{tpu_custom_call.1} parent=1 // pred_check_branch
      %71 = sbr.rel (0) target = $region25
    $region24: #{tpu_custom_call.1} parent=1 // pred_region
      _
    $region25: #{tpu_custom_call.1} parent=1 // pred_fallthru
      _
    // Predicated region
    $region26: #{tpu_custom_call.1} parent=1 // pred_check
      _
    $region27: #{tpu_custom_call.1} parent=1 // pred_check_branch
      %73 = sbr.rel (0) target = $region29
    $region28: #{tpu_custom_call.1} parent=1 // pred_region
      %75 = vsyncadd [#allocation9], 0
      %s76 = sshll.u32 %s6, 4
      %s77 = int_to_ptr.hbm [resolvable:$true] %s76
      %s78 = sshll.u32 [#allocation10], 4
      %s79 = int_to_ptr.vmem [resolvable:$true] %s78
      %84 = dma.hbm_to_vmem [thread:$0]  %s77, 4096, %s79, [#allocation9], 256, 256, 16
    $region29: #{tpu_custom_call.1} parent=1 // pred_fallthru
      _
    // Predicated region
    $region30: #{tpu_custom_call.1} parent=1 // pred_check
      _
    $region31: #{tpu_custom_call.1} parent=1 // pred_check_branch
      %86 = sbr.rel (0) target = $region33
    $region32: #{tpu_custom_call.1} parent=1 // pred_region
      _
    $region33: #{tpu_custom_call.1} parent=1 // pred_fallthru
      _
    // Predicated region
    $region34: #{tpu_custom_call.1} parent=1 // pred_check
      _
    $region35: #{tpu_custom_call.1} parent=1 // pred_check_branch
      %88 = sbr.rel (0) target = $region37
    $region36: #{tpu_custom_call.1} parent=1 // pred_region
      %90 = vsyncadd [#allocation12], 0
      %s91 = sshll.u32 %s8, 4
      %s92 = int_to_ptr.hbm [resolvable:$true] %s91
      %s93 = sshll.u32 [#allocation11], 4
      %s94 = int_to_ptr.vmem [resolvable:$true] %s93
      %99 = dma.hbm_to_vmem [thread:$0]  %s92, 4096, %s94, [#allocation12], 128, 128, 8
    $region37: #{tpu_custom_call.1} parent=1 // pred_fallthru
      _
    // Predicated region
    $region38: #{tpu_custom_call.1} parent=1 // pred_check
      _
    $region39: #{tpu_custom_call.1} parent=1 // pred_check_branch
      %101 = sbr.rel (0) target = $region41
    $region40: #{tpu_custom_call.1} parent=1 // pred_region
      _
    $region41: #{tpu_custom_call.1} parent=1 // pred_fallthru
      _
    // Predicated region
    $region42: #{tpu_custom_call.1} parent=1 // pred_check
      _
    $region43: #{tpu_custom_call.1} parent=1 // pred_check_branch
      %103 = sbr.rel (0) target = $region45
    $region44: #{tpu_custom_call.1} parent=1 // pred_region
      %105 = dma.done [#allocation3], 128
    $region45: #{tpu_custom_call.1} parent=1 // pred_fallthru
      _
    // Predicated region
    $region46: #{tpu_custom_call.1} parent=1 // pred_check
      _
    $region47: #{tpu_custom_call.1} parent=1 // pred_check_branch
      %107 = sbr.rel (0) target = $region49
    $region48: #{tpu_custom_call.1} parent=1 // pred_region
      %109 = dma.done [#allocation6], 16
    $region49: #{tpu_custom_call.1} parent=1 // pred_fallthru
      _
    // Predicated region
    $region50: #{tpu_custom_call.1} parent=1 // pred_check
      _
    $region51: #{tpu_custom_call.1} parent=1 // pred_check_branch
      %111 = sbr.rel (0) target = $region53
    $region52: #{tpu_custom_call.1} parent=1 // pred_region
      %113 = dma.done [#allocation6], 256
    $region53: #{tpu_custom_call.1} parent=1 // pred_fallthru
      _
    // Predicated region
    $region54: #{tpu_custom_call.1} parent=1 // pred_check
      _
    $region55: #{tpu_custom_call.1} parent=1 // pred_check_branch
      %115 = sbr.rel (0) target = $region57
    $region56: #{tpu_custom_call.1} parent=1 // pred_region
      %117 = dma.done [#allocation9], 2048
    $region57: #{tpu_custom_call.1} parent=1 // pred_fallthru
      _
    // Predicated region
    $region58: #{tpu_custom_call.1} parent=1 // pred_check
      _
    $region59: #{tpu_custom_call.1} parent=1 // pred_check_branch
      %119 = sbr.rel (0) target = $region61
    $region60: #{tpu_custom_call.1} parent=1 // pred_region
      %121 = dma.done [#allocation9], 4096
    $region61: #{tpu_custom_call.1} parent=1 // pred_fallthru
      _
    // Predicated region
    $region62: #{tpu_custom_call.1} parent=1 // pred_check
      _
    $region63: #{tpu_custom_call.1} parent=1 // pred_check_branch
      %123 = sbr.rel (0) target = $region65
    $region64: #{tpu_custom_call.1} parent=1 // pred_region
      %125 = dma.done [#allocation12], 4096
    $region65: #{tpu_custom_call.1} parent=1 // pred_fallthru
      _
    %v126 = vld [vmem:[#allocation2] sm:$0xff]
    %v127 = vld [vmem:[#allocation7] sm:$0xff]
    %v128 = vld [vmem:[#allocation7 + $0x8] sm:$0xff]
    %v129 = vld [vmem:[%s3] sm:$0x1]
    %v131 = vperm.slane %v129, 0
    %vm133 = vcmask 130048
    %v135 = vsel %vm133, %v126, 0
    %137 = vmatpush.msra.mxu0 0.0
    %138 = vmatpush.msra.mxu0 0.0
    %139 = vmatpush.msra.mxu0 0.0
    %140 = vmatpush.msra.mxu0 0.0
    %141 = vmatpush.msra.mxu0 0.0
    %142 = vmatpush.msra.mxu0 0.0
    %143 = vmatpush.msra.mxu0 0.0
    %144 = vmatpush.msra.mxu0 0.0
    %145 = vmatpush.msra.mxu0 0.0
    %146 = vmatpush.msra.mxu0 0.0
    %147 = vmatpush.msra.mxu0 0.0
    %148 = vmatpush.msra.mxu0 0.0
    %149 = vmatpush.msra.mxu0 0.0
    %150 = vmatpush.msra.mxu0 0.0
    %151 = vmatpush.msra.mxu0 %v128
    %152 = vmatpush.msra.mxu0 %v127
    %153 = vmatmul.f32.gmra.mxu0 %v135
    %v154 = vpop.f32.mrf.mxu0
    %v155 = vadd.f32 %v131, %v154
    %156 = vdwg.mxu0
    %v157 = vmax.f32 %v155, 0.0
    %v158 = vld [vmem:[#allocation8] sm:$0xff]
    %v159 = vld [vmem:[#allocation8 + $0x8] sm:$0xff]
    %v160 = vld [vmem:[#allocation8 + $0x10] sm:$0xff]
    %v161 = vld [vmem:[#allocation8 + $0x18] sm:$0xff]
    %v162 = vld [vmem:[#allocation8 + $0x20] sm:$0xff]
    %v163 = vld [vmem:[#allocation8 + $0x28] sm:$0xff]
    %v164 = vld [vmem:[#allocation8 + $0x30] sm:$0xff]
    %v165 = vld [vmem:[#allocation8 + $0x38] sm:$0xff]
    %v166 = vld [vmem:[#allocation8 + $0x40] sm:$0xff]
    %v167 = vld [vmem:[#allocation8 + $0x48] sm:$0xff]
    %v168 = vld [vmem:[#allocation8 + $0x50] sm:$0xff]
    %v169 = vld [vmem:[#allocation8 + $0x58] sm:$0xff]
    %v170 = vld [vmem:[#allocation8 + $0x60] sm:$0xff]
    %v171 = vld [vmem:[#allocation8 + $0x68] sm:$0xff]
    %v172 = vld [vmem:[#allocation8 + $0x70] sm:$0xff]
    %v173 = vld [vmem:[#allocation8 + $0x78] sm:$0xff]
    %v174 = vld [vmem:[%s5] sm:$0x1]
    %v176 = vperm.slane %v174, 0
    %178 = vmatpush.msra.mxu0 %v173
    %179 = vmatpush.msra.mxu0 %v172
    %180 = vmatpush.msra.mxu0 %v171
    %181 = vmatpush.msra.mxu0 %v170
    %182 = vmatpush.msra.mxu0 %v169
    %183 = vmatpush.msra.mxu0 %v168
    %184 = vmatpush.msra.mxu0 %v167
    %185 = vmatpush.msra.mxu0 %v166
    %186 = vmatpush.msra.mxu0 %v165
    %187 = vmatpush.msra.mxu0 %v164
    %188 = vmatpush.msra.mxu0 %v163
    %189 = vmatpush.msra.mxu0 %v162
    %190 = vmatpush.msra.mxu0 %v161
    %191 = vmatpush.msra.mxu0 %v160
    %192 = vmatpush.msra.mxu0 %v159
    %193 = vmatpush.msra.mxu0 %v158
    %194 = vmatmul.f32.gmra.mxu0 %v157
    %v195 = vpop.f32.mrf.mxu0
    %v196 = vadd.f32 %v176, %v195
    %197 = vdwg.mxu0
    %v198 = vmax.f32 %v196, 0.0
    %v199 = vld [vmem:[#allocation10] sm:$0xff]
    %v200 = vld [vmem:[#allocation10 + $0x8] sm:$0xff]
    %v201 = vld [vmem:[#allocation10 + $0x10] sm:$0xff]
    %v202 = vld [vmem:[#allocation10 + $0x18] sm:$0xff]
    %v203 = vld [vmem:[#allocation10 + $0x20] sm:$0xff]
    %v204 = vld [vmem:[#allocation10 + $0x28] sm:$0xff]
    %v205 = vld [vmem:[#allocation10 + $0x30] sm:$0xff]
    %v206 = vld [vmem:[#allocation10 + $0x38] sm:$0xff]
    %v207 = vld [vmem:[#allocation10 + $0x40] sm:$0xff]
    %v208 = vld [vmem:[#allocation10 + $0x48] sm:$0xff]
    %v209 = vld [vmem:[#allocation10 + $0x50] sm:$0xff]
    %v210 = vld [vmem:[#allocation10 + $0x58] sm:$0xff]
    %v211 = vld [vmem:[#allocation10 + $0x60] sm:$0xff]
    %v212 = vld [vmem:[#allocation10 + $0x68] sm:$0xff]
    %v213 = vld [vmem:[#allocation10 + $0x70] sm:$0xff]
    %v214 = vld [vmem:[#allocation10 + $0x78] sm:$0xff]
    %v215 = vld [vmem:[#allocation10 + $0x80] sm:$0xff]
    %v216 = vld [vmem:[#allocation10 + $0x88] sm:$0xff]
    %v217 = vld [vmem:[#allocation10 + $0x90] sm:$0xff]
    %v218 = vld [vmem:[#allocation10 + $0x98] sm:$0xff]
    %v219 = vld [vmem:[#allocation10 + $0xa0] sm:$0xff]
    %v220 = vld [vmem:[#allocation10 + $0xa8] sm:$0xff]
    %v221 = vld [vmem:[#allocation10 + $0xb0] sm:$0xff]
    %v222 = vld [vmem:[#allocation10 + $0xb8] sm:$0xff]
    %v223 = vld [vmem:[#allocation10 + $0xc0] sm:$0xff]
    %v224 = vld [vmem:[#allocation10 + $0xc8] sm:$0xff]
    %v225 = vld [vmem:[#allocation10 + $0xd0] sm:$0xff]
    %v226 = vld [vmem:[#allocation10 + $0xd8] sm:$0xff]
    %v227 = vld [vmem:[#allocation10 + $0xe0] sm:$0xff]
    %v228 = vld [vmem:[#allocation10 + $0xe8] sm:$0xff]
    %v229 = vld [vmem:[#allocation10 + $0xf0] sm:$0xff]
    %v230 = vld [vmem:[#allocation10 + $0xf8] sm:$0xff]
    %v231 = vld [vmem:[%s7] sm:$0x3]
    %v233 = vperm.slane %v231, 0
    %v234 = vperm.slane %v231, 1
    %237 = vmatpush.msra.mxu0 %v229
    %238 = vmatpush.msra.mxu0 %v227
    %239 = vmatpush.msra.mxu0 %v225
    %240 = vmatpush.msra.mxu0 %v223
    %241 = vmatpush.msra.mxu0 %v221
    %242 = vmatpush.msra.mxu0 %v219
    %243 = vmatpush.msra.mxu0 %v217
    %244 = vmatpush.msra.mxu0 %v215
    %245 = vmatpush.msra.mxu0 %v213
    %246 = vmatpush.msra.mxu0 %v211
    %247 = vmatpush.msra.mxu0 %v209
    %248 = vmatpush.msra.mxu0 %v207
    %249 = vmatpush.msra.mxu0 %v205
    %250 = vmatpush.msra.mxu0 %v203
    %251 = vmatpush.msra.mxu0 %v201
    %252 = vmatpush.msra.mxu0 %v199
    %253 = vmatmul.f32.gmra.mxu0 %v198
    %v254 = vpop.f32.mrf.mxu0
    %v255 = vadd.f32 %v233, %v254
    %256 = vdwg.mxu0
    %257 = vmatpush.msra.mxu0 %v230
    %258 = vmatpush.msra.mxu0 %v228
    %259 = vmatpush.msra.mxu0 %v226
    %260 = vmatpush.msra.mxu0 %v224
    %261 = vmatpush.msra.mxu0 %v222
    %262 = vmatpush.msra.mxu0 %v220
    %263 = vmatpush.msra.mxu0 %v218
    %264 = vmatpush.msra.mxu0 %v216
    %265 = vmatpush.msra.mxu0 %v214
    %266 = vmatpush.msra.mxu0 %v212
    %267 = vmatpush.msra.mxu0 %v210
    %268 = vmatpush.msra.mxu0 %v208
    %269 = vmatpush.msra.mxu0 %v206
    %270 = vmatpush.msra.mxu0 %v204
    %271 = vmatpush.msra.mxu0 %v202
    %272 = vmatpush.msra.mxu0 %v200
    %273 = vmatmul.f32.gmra.mxu0 %v198
    %v274 = vpop.f32.mrf.mxu0
    %v275 = vadd.f32 %v234, %v274
    %276 = vdwg.mxu0
    %v277 = vmax.f32 %v255, 0.0
    %v278 = vmax.f32 %v275, 0.0
    %v279 = vld [vmem:[#allocation11] sm:$0xff]
    %v280 = vld [vmem:[#allocation11 + $0x8] sm:$0xff]
    %v281 = vld [vmem:[#allocation11 + $0x10] sm:$0xff]
    %v282 = vld [vmem:[#allocation11 + $0x18] sm:$0xff]
    %v283 = vld [vmem:[#allocation11 + $0x20] sm:$0xff]
    %v284 = vld [vmem:[#allocation11 + $0x28] sm:$0xff]
    %v285 = vld [vmem:[#allocation11 + $0x30] sm:$0xff]
    %v286 = vld [vmem:[#allocation11 + $0x38] sm:$0xff]
    %v287 = vld [vmem:[#allocation11 + $0x40] sm:$0xff]
    %v288 = vld [vmem:[#allocation11 + $0x48] sm:$0xff]
    %v289 = vld [vmem:[#allocation11 + $0x50] sm:$0xff]
    %v290 = vld [vmem:[#allocation11 + $0x58] sm:$0xff]
    %v291 = vld [vmem:[#allocation11 + $0x60] sm:$0xff]
    %v292 = vld [vmem:[#allocation11 + $0x68] sm:$0xff]
    %v293 = vld [vmem:[#allocation11 + $0x70] sm:$0xff]
    %v294 = vld [vmem:[#allocation11 + $0x78] sm:$0xff]
    %v295 = vld [vmem:[#allocation11 + $0x80] sm:$0xff]
    %v296 = vld [vmem:[#allocation11 + $0x88] sm:$0xff]
    %v297 = vld [vmem:[#allocation11 + $0x90] sm:$0xff]
    %v298 = vld [vmem:[#allocation11 + $0x98] sm:$0xff]
    %v299 = vld [vmem:[#allocation11 + $0xa0] sm:$0xff]
    %v300 = vld [vmem:[#allocation11 + $0xa8] sm:$0xff]
    %v301 = vld [vmem:[#allocation11 + $0xb0] sm:$0xff]
    %v302 = vld [vmem:[#allocation11 + $0xb8] sm:$0xff]
    %v303 = vld [vmem:[#allocation11 + $0xc0] sm:$0xff]
    %v304 = vld [vmem:[#allocation11 + $0xc8] sm:$0xff]
    %v305 = vld [vmem:[#allocation11 + $0xd0] sm:$0xff]
    %v306 = vld [vmem:[#allocation11 + $0xd8] sm:$0xff]
    %v307 = vld [vmem:[#allocation11 + $0xe0] sm:$0xff]
    %v308 = vld [vmem:[#allocation11 + $0xe8] sm:$0xff]
    %v309 = vld [vmem:[#allocation11 + $0xf0] sm:$0xff]
    %v310 = vld [vmem:[#allocation11 + $0xf8] sm:$0xff]
    %v311 = vld [vmem:[%s9] sm:$0x1]
    %v313 = vperm.slane %v311, 0
    %315 = vmatpush.msra.mxu0 %v294
    %316 = vmatpush.msra.mxu0 %v293
    %317 = vmatpush.msra.mxu0 %v292
    %318 = vmatpush.msra.mxu0 %v291
    %319 = vmatpush.msra.mxu0 %v290
    %320 = vmatpush.msra.mxu0 %v289
    %321 = vmatpush.msra.mxu0 %v288
    %322 = vmatpush.msra.mxu0 %v287
    %323 = vmatpush.msra.mxu0 %v286
    %324 = vmatpush.msra.mxu0 %v285
    %325 = vmatpush.msra.mxu0 %v284
    %326 = vmatpush.msra.mxu0 %v283
    %327 = vmatpush.msra.mxu0 %v282
    %328 = vmatpush.msra.mxu0 %v281
    %329 = vmatpush.msra.mxu0 %v280
    %330 = vmatpush.msra.mxu0 %v279
    %331 = vmatmul.f32.gmra.mxu0 %v277
    %v332 = vpop.f32.mrf.mxu0
    %v333 = vadd.f32 %v313, %v332
    %334 = vdwg.mxu0
    %335 = vmatpush.msra.mxu0 %v310
    %336 = vmatpush.msra.mxu0 %v309
    %337 = vmatpush.msra.mxu0 %v308
    %338 = vmatpush.msra.mxu0 %v307
    %339 = vmatpush.msra.mxu0 %v306
    %340 = vmatpush.msra.mxu0 %v305
    %341 = vmatpush.msra.mxu0 %v304
    %342 = vmatpush.msra.mxu0 %v303
    %343 = vmatpush.msra.mxu0 %v302
    %344 = vmatpush.msra.mxu0 %v301
    %345 = vmatpush.msra.mxu0 %v300
    %346 = vmatpush.msra.mxu0 %v299
    %347 = vmatpush.msra.mxu0 %v298
    %348 = vmatpush.msra.mxu0 %v297
    %349 = vmatpush.msra.mxu0 %v296
    %350 = vmatpush.msra.mxu0 %v295
    %351 = vmatmul.f32.gmra.mxu0 %v278
    %v352 = vpop.f32.mrf.mxu0
    %v353 = vadd.f32 %v333, %v352
    %354 = vdwg.mxu0
    %v355 = vld [vmem:[#allocation5] sm:$0x1]
    %v357 = vperm.slane %v355, 0
    %v359 = vmul.f32 %v353, %v357
    %360 = vst [vmem:[#allocation13] sm:$0xff] %v359
    // Predicated region
    $region66: #{tpu_custom_call.1} parent=1 // pred_check
      _
    $region67: #{tpu_custom_call.1} parent=1 // pred_check_branch
      %362 = sbr.rel (0) target = $region69
    $region68: #{tpu_custom_call.1} parent=1 // pred_region
      %364 = vsyncadd [#allocation4], 0
      %s366 = sshll.u32 [#allocation13], 4
      %s367 = int_to_ptr.vmem [resolvable:$true] %s366
      %s368 = sshll.u32 %s10, 4
      %s369 = int_to_ptr.hbm [resolvable:$true] %s368
      %371 = dma.vmem_to_hbm [thread:$0]  %s367, 128, %s369, [#allocation4]
    $region69: #{tpu_custom_call.1} parent=1 // pred_fallthru
      _
    // Predicated region
    $region70: #{tpu_custom_call.1} parent=1 // pred_check
      _
    $region71: #{tpu_custom_call.1} parent=1 // pred_check_branch
      %373 = sbr.rel (0) target = $region73
    $region72: #{tpu_custom_call.1} parent=1 // pred_region
      %375 = dma.done [#allocation4], 128
    $region73: #{tpu_custom_call.1} parent=1 // pred_fallthru
      _
    %376 = vsyncpa [#allocation3], 1
    %377 = vsyncpa [#allocation6], 1
    %378 = vsyncpa [#allocation9], 1
    %379 = vsyncpa [#allocation12], 1
    %380 = vsyncpa [#allocation4], 1

</llo_original>
